<compile_context>
chip_gen: v7x
topology: tpu7x:2x2x1
jax: 0.10.0
libtpu: 0.0.40
codegen_flags: <defaults>
</compile_context>

<pallas_src>
import functools

import jax
import jax.numpy as jnp
import numpy as np
from jax.experimental import pallas as pl
from jax.experimental.pallas import tpu as pltpu

_LANE = 128
_SUBLANE = 8


def _round_up(v, m):
    return (v + m - 1) // m * m


def _vmem_limit_bytes():
    """~80% of physical VMEM: ~51 MiB on v7x (64 MiB/TC), ~102 MiB on v5e/v6e (128 MiB)."""
    cap = 64 * 1024 * 1024
    try:
        cap = int(pltpu.get_tpu_info().vmem_capacity_bytes)
    except Exception:
        pass
    return min(int(cap * 0.8), 112 * 1024 * 1024)


def _sage_layer_kernel(a_ref, xsrc_ref, xroot_ref, invdeg_ref, wcat_ref, b_ref,
                       o_ref, acc_ref, *, relu):
    """One SAGEConv layer, row tile i, contraction (aggregation) tile k.

    a_ref      : (TM, TK)        bf16 0/1 edge counts for this (row, col) block of A
    xsrc_ref   : (TK, Fin)       source-node features for this contraction chunk
    xroot_ref  : (TM, Fin)       root-node features for this row tile
    invdeg_ref : (TM, 1)         f32 1/max(deg,1) for this row tile
    wcat_ref   : (2*Fin, Fout)   fused [Wl^T ; Wr^T]  (padded, resident, single-buffered)
    b_ref      : (1, Fout)       lin_l bias row       (padded, resident, single-buffered)
    o_ref      : (TM, Fout)
    acc_ref    : (TM, Fin) f32   aggregation accumulator (VMEM scratch)
    """
    k = pl.program_id(1)

    @pl.when(k == 0)
    def _():
        acc_ref[...] = jnp.zeros_like(acc_ref)

    # Partial aggregation: bf16 counts upcast on the VPU, f32 MXU accumulation.
    a = a_ref[...].astype(jnp.float32)
    acc_ref[...] += jnp.dot(a, xsrc_ref[...], preferred_element_type=jnp.float32)

    @pl.when(k == pl.num_programs(1) - 1)
    def _():
        agg = acc_ref[...] * invdeg_ref[...]                    # mean via f32 1/deg scale
        cat = jnp.concatenate([agg, xroot_ref[...]], axis=1)    # (TM, 2*Fin), lane-aligned
        h = (jnp.dot(cat, wcat_ref[...], preferred_element_type=jnp.float32)
             + b_ref[...])                                      # fused K=2*Fin projection
        if relu:
            h = jnp.maximum(h, 0.0)
        o_ref[...] = h.astype(o_ref.dtype)


def _sage_layer(a, inv_deg, x, wcat, b_row, *, relu, tm, tk, vmem_limit):
    n_pad = a.shape[0]
    f_in = x.shape[1]
    f_out = wcat.shape[1]
    grid = (n_pad // tm, n_pad // tk)

    cost = pl.CostEstimate(
        flops=2 * n_pad * n_pad * f_in + 2 * n_pad * (2 * f_in) * f_out,
        transcendentals=0,
        bytes_accessed=(a.size * 2                              # bf16 adjacency counts
                        + (n_pad // tm) * n_pad * f_in * 4      # x re-read per row tile
                        + n_pad * f_in * 4                      # root features
                        + inv_deg.size * 4 + wcat.size * 4 + b_row.size * 4
                        + n_pad * f_out * 4),
    )

    return pl.pallas_call(
        functools.partial(_sage_layer_kernel, relu=relu),
        out_shape=jax.ShapeDtypeStruct((n_pad, f_out), jnp.float32),
        grid=grid,
        in_specs=[
            pl.BlockSpec((tm, tk), lambda i, k: (i, k)),        # A block (bf16, pipelined)
            pl.BlockSpec((tk, f_in), lambda i, k: (k, 0)),      # x chunk for aggregation
            pl.BlockSpec((tm, f_in), lambda i, k: (i, 0)),      # root feats for row tile
            pl.BlockSpec((tm, 1), lambda i, k: (i, 0)),         # 1/deg for row tile
            pl.BlockSpec((2 * f_in, f_out), lambda i, k: (0, 0),
                         pipeline_mode=pl.Buffered(1)),         # fused weights (resident)
            pl.BlockSpec((1, f_out), lambda i, k: (0, 0),
                         pipeline_mode=pl.Buffered(1)),         # bias row (resident)
        ],
        out_specs=pl.BlockSpec((tm, f_out), lambda i, k: (i, 0)),
        scratch_shapes=[pltpu.VMEM((tm, f_in), jnp.float32)],
        compiler_params=pltpu.CompilerParams(
            dimension_semantics=("parallel", "arbitrary"),      # rows split across v7x TCs
            vmem_limit_bytes=vmem_limit,
        ),
        cost_estimate=cost,
    )(a, x, x, inv_deg, wcat, b_row)


def graphsage_forward(x, edge_index, params):
    """x: [N, F] float32; edge_index: [1, 2, E] or [2, E] int32."""
    if edge_index.ndim == 3:
        edge_index = jnp.squeeze(edge_index, axis=0)   # mirrors edge_index.squeeze(0)
    src, dst = edge_index[0], edge_index[1]

    n, f = x.shape
    hidden = params["wl1"].shape[0]

    f_pad = _round_up(f, _LANE)
    h_pad = _round_up(hidden, _LANE)
    # Node padding to a multiple of 128: A's last dim is both the lane axis and the MXU
    # contraction dim, so keep it lane-dense.
    n_pad = _round_up(n, _LANE)

    # Row tile: prefer enough tiles to feed both v7x TensorCores once per-tile work
    # amortizes the ~0.35us grid-step overhead; larger tm on bigger graphs.
    tm = 256 if (n_pad >= 2048 and n_pad % 256 == 0) else 128
    # Contraction tile: caps per-step A / x chunks at a constant VMEM size regardless of N.
    if n_pad <= 1024:
        tk = n_pad
    else:
        tk = max(c for c in (1024, 512, 256, 128) if n_pad % c == 0)

    vmem_limit = _vmem_limit_bytes()

    # Dense adjacency as exact 0/1 (edge-multiplicity) counts; bf16 halves the O(N^2)
    # HBM stream (counts up to 256 are exact in bf16).  1/deg normalization stays in f32
    # and is applied post-matmul inside the kernel.
    counts = jnp.zeros((n_pad, n_pad), jnp.float32).at[dst, src].add(1.0)
    deg = jnp.sum(counts, axis=1, keepdims=True)
    inv_deg = 1.0 / jnp.maximum(deg, 1.0)              # (n_pad, 1) f32
    a_bf16 = counts.astype(jnp.bfloat16)

    x_p = jnp.pad(x.astype(jnp.float32), ((0, n_pad - n), (0, f_pad - f)))

    def fused_w(wl, wr, in_pad, out_pad):
        # torch layout [out, in] -> [in, out], zero-pad, stack for one K=2*in_pad matmul.
        def pad_t(w):
            wt = w.T.astype(jnp.float32)
            return jnp.pad(wt, ((0, in_pad - wt.shape[0]), (0, out_pad - wt.shape[1])))
        return jnp.concatenate([pad_t(wl), pad_t(wr)], axis=0)   # (2*in_pad, out_pad)

    def pad_b(b, cols):
        return jnp.pad(b.astype(jnp.float32), (0, cols - b.shape[0])).reshape(1, cols)

    w1 = fused_w(params["wl1"], params["wr1"], f_pad, h_pad)
    b1 = pad_b(params["bl1"], h_pad)
    w2 = fused_w(params["wl2"], params["wr2"], h_pad, f_pad)
    b2 = pad_b(params["bl2"], f_pad)

    h1 = _sage_layer(a_bf16, inv_deg, x_p, w1, b1, relu=True,
                     tm=tm, tk=tk, vmem_limit=vmem_limit)
    out = _sage_layer(a_bf16, inv_deg, h1, w2, b2, relu=False,
                      tm=tm, tk=tk, vmem_limit=vmem_limit)
    return out[:n, :f]


def _reference_forward(x, edge_index, params):
    """Pure-JAX reference with identical semantics (for verification)."""
    if edge_index.ndim == 3:
        edge_index = jnp.squeeze(edge_index, axis=0)
    src, dst = edge_index[0], edge_index[1]
    n = x.shape[0]
    a = jnp.zeros((n, n), dtype=jnp.float32).at[dst, src].add(1.0)
    a = a / jnp.maximum(jnp.sum(a, axis=1, keepdims=True), 1.0)

    agg1 = a @ x
    h1 = jax.nn.relu(agg1 @ params["wl1"].T + params["bl1"] + x @ params["wr1"].T)
    agg2 = a @ h1
    return agg2 @ params["wl2"].T + params["bl2"] + h1 @ params["wr2"].T


def init_params(key, num_features, hidden=16):
    ks = jax.random.split(key, 6)

    def lin(k, out_c, in_c):
        bound = 1.0 / np.sqrt(in_c)
        return jax.random.uniform(k, (out_c, in_c), jnp.float32, -bound, bound)

    return {
        "wl1": lin(ks[0], hidden, num_features),
        "bl1": jax.random.uniform(ks[1], (hidden,), jnp.float32,
                                  -1.0 / np.sqrt(num_features), 1.0 / np.sqrt(num_features)),
        "wr1": lin(ks[2], hidden, num_features),
        "wl2": lin(ks[3], num_features, hidden),
        "bl2": jax.random.uniform(ks[4], (num_features,), jnp.float32,
                                  -1.0 / np.sqrt(hidden), 1.0 / np.sqrt(hidden)),
        "wr2": lin(ks[5], num_features, hidden),
    }


if __name__ == "__main__":
    key = jax.random.PRNGKey(0)
    k_x, k_e, k_p = jax.random.split(key, 3)

    num_nodes = 16
    num_features = 8
    num_edges = 40

    x = jax.random.normal(k_x, (num_nodes, num_features), dtype=jnp.float32)
    edge_index = jax.random.randint(k_e, (1, 2, num_edges), 0, num_nodes, dtype=jnp.int32)

    params = init_params(k_p, num_features, hidden=16)

    out = graphsage_forward(x, edge_index, params)
    out = jax.block_until_ready(out)

    ref = _reference_forward(x, edge_index, params)
    np.testing.assert_allclose(np.asarray(out), np.asarray(ref), rtol=1e-4, atol=1e-4)

    print("KERNEL_OK")
</pallas_src>

<mosaic_0001>
module attributes {stable_mosaic.version = 11 : i64} {
  func.func @_sage_layer_kernel(%arg0: i32, %arg1: i32, %arg2: memref<128x128xbf16, #tpu.memory_space<vmem>>, %arg3: memref<128x128xf32, #tpu.memory_space<vmem>>, %arg4: memref<128x128xf32, #tpu.memory_space<vmem>>, %arg5: memref<128x1xf32, #tpu.memory_space<vmem>>, %arg6: memref<256x128xf32, #tpu.memory_space<vmem>>, %arg7: memref<1x128xf32, #tpu.memory_space<vmem>>, %arg8: memref<128x128xf32, #tpu.memory_space<vmem>>, %arg9: memref<128x128xf32, #tpu.memory_space<vmem>>) attributes {dimension_semantics = [#tpu.dimension_semantics<parallel>, #tpu.dimension_semantics<arbitrary>], iteration_bounds = array<i64: 1, 1>, scalar_prefetch = 0 : i64, scratch_operands = 1 : i64, tpu.core_type = #tpu.core_type<tc>, window_params = [{transform_indices = @transform_0, window_bounds = array<i64: 128, 128>}, {transform_indices = @transform_1, window_bounds = array<i64: 128, 128>}, {transform_indices = @transform_2, window_bounds = array<i64: 128, 128>}, {transform_indices = @transform_3, window_bounds = array<i64: 128, 1>}, {pipeline_mode = #tpu.pipeline_mode<synchronous>, transform_indices = @transform_4, window_bounds = array<i64: 256, 128>}, {pipeline_mode = #tpu.pipeline_mode<synchronous>, transform_indices = @transform_5, window_bounds = array<i64: 1, 128>}, {transform_indices = @transform_6, window_bounds = array<i64: 128, 128>}]} {
    %c0_i32 = arith.constant 0 : i32
    %0 = arith.cmpi eq, %arg1, %c0_i32 : i32
    %1 = arith.extui %0 : i1 to i32
    %c0_i32_0 = arith.constant 0 : i32
    %2 = arith.cmpi ne, %1, %c0_i32_0 : i32
    scf.if %2 {
      %cst_10 = arith.constant 0.000000e+00 : f32
      %13 = vector.broadcast %cst_10 : f32 to vector<128x128xf32>
      %c0_11 = arith.constant 0 : index
      %c0_12 = arith.constant 0 : index
      %14 = vector.load %arg9[%c0_11, %c0_12] : memref<128x128xf32, #tpu.memory_space<vmem>>, vector<128x128xf32>
      tpu.vector_store %arg9[%c0_11, %c0_12], %13 {strides = array<i32>} : memref<128x128xf32, #tpu.memory_space<vmem>>, vector<128x128xf32>,
    } else {
    }
    %c0 = arith.constant 0 : index
    %c0_1 = arith.constant 0 : index
    %3 = vector.load %arg2[%c0, %c0_1] : memref<128x128xbf16, #tpu.memory_space<vmem>>, vector<128x128xbf16>
    %4 = arith.extf %3 : vector<128x128xbf16> to vector<128x128xf32>
    %c0_2 = arith.constant 0 : index
    %c0_3 = arith.constant 0 : index
    %5 = vector.load %arg9[%c0_2, %c0_3] : memref<128x128xf32, #tpu.memory_space<vmem>>, vector<128x128xf32>
    %c0_4 = arith.constant 0 : index
    %c0_5 = arith.constant 0 : index
    %6 = vector.load %arg3[%c0_4, %c0_5] : memref<128x128xf32, #tpu.memory_space<vmem>>, vector<128x128xf32>
    %cst = arith.constant dense<0.000000e+00> : vector<128x128xf32>
    %7 = tpu.matmul %4, %6, %cst {dimension_numbers = #tpu.dot_dimension_numbers<[1], [0], [0], [1], [0, 0, 1, 1], [], []>} : vector<128x128xf32>, vector<128x128xf32>, vector<128x128xf32> -> vector<128x128xf32>
    %8 = arith.addf %5, %7 : vector<128x128xf32>
    %c0_6 = arith.constant 0 : index
    %c0_7 = arith.constant 0 : index
    %9 = vector.load %arg9[%c0_6, %c0_7] : memref<128x128xf32, #tpu.memory_space<vmem>>, vector<128x128xf32>
    tpu.vector_store %arg9[%c0_6, %c0_7], %8 {strides = array<i32>} : memref<128x128xf32, #tpu.memory_space<vmem>>, vector<128x128xf32>,
    %c0_i32_8 = arith.constant 0 : i32
    %10 = arith.cmpi eq, %arg1, %c0_i32_8 : i32
    %11 = arith.extui %10 : i1 to i32
    %c0_i32_9 = arith.constant 0 : i32
    %12 = arith.cmpi ne, %11, %c0_i32_9 : i32
    scf.if %12 {
      %c0_10 = arith.constant 0 : index
      %c0_11 = arith.constant 0 : index
      %13 = vector.load %arg9[%c0_10, %c0_11] : memref<128x128xf32, #tpu.memory_space<vmem>>, vector<128x128xf32>
      %c0_12 = arith.constant 0 : index
      %c0_13 = arith.constant 0 : index
      %14 = vector.load %arg5[%c0_12, %c0_13] : memref<128x1xf32, #tpu.memory_space<vmem>>, vector<128x1xf32>
      %15 = vector.broadcast %14 : vector<128x1xf32> to vector<128x128xf32>
      %16 = arith.mulf %13, %15 : vector<128x128xf32>
      %c0_14 = arith.constant 0 : index
      %c0_15 = arith.constant 0 : index
      %17 = vector.load %arg4[%c0_14, %c0_15] : memref<128x128xf32, #tpu.memory_space<vmem>>, vector<128x128xf32>
      %18 = tpu.concatenate %16, %17 in 1 : vector<128x128xf32>, vector<128x128xf32> -> vector<128x256xf32>
      %c0_16 = arith.constant 0 : index
      %c0_17 = arith.constant 0 : index
      %19 = vector.load %arg6[%c0_16, %c0_17] : memref<256x128xf32, #tpu.memory_space<vmem>>, vector<256x128xf32>
      %cst_18 = arith.constant dense<0.000000e+00> : vector<128x128xf32>
      %20 = tpu.matmul %18, %19, %cst_18 {dimension_numbers = #tpu.dot_dimension_numbers<[1], [0], [0], [1], [0, 0, 1, 1], [], []>} : vector<128x256xf32>, vector<256x128xf32>, vector<128x128xf32> -> vector<128x128xf32>
      %c0_19 = arith.constant 0 : index
      %c0_20 = arith.constant 0 : index
      %21 = vector.load %arg7[%c0_19, %c0_20] : memref<1x128xf32, #tpu.memory_space<vmem>>, vector<1x128xf32>
      %22 = vector.broadcast %21 : vector<1x128xf32> to vector<128x128xf32>
      %23 = arith.addf %20, %22 : vector<128x128xf32>
      %cst_21 = arith.constant 0.000000e+00 : f32
      %24 = vector.broadcast %cst_21 : f32 to vector<128x128xf32>
      %25 = arith.maximumf %23, %24 : vector<128x128xf32>
      %c0_22 = arith.constant 0 : index
      %c0_23 = arith.constant 0 : index
      %26 = vector.load %arg8[%c0_22, %c0_23] : memref<128x128xf32, #tpu.memory_space<vmem>>, vector<128x128xf32>
      tpu.vector_store %arg8[%c0_22, %c0_23], %25 {strides = array<i32>} : memref<128x128xf32, #tpu.memory_space<vmem>>, vector<128x128xf32>,
    } else {
    }
    return
  }
  func.func @transform_0(%arg0: i32, %arg1: i32) -> (i32, i32) {
    %c0_i32 = arith.constant 0 : i32
    return %arg0, %arg1 : i32, i32
  }
  func.func @transform_1(%arg0: i32, %arg1: i32) -> (i32, i32) {
    %c0_i32 = arith.constant 0 : i32
    %c0_i32_0 = arith.constant 0 : i32
    return %arg1, %c0_i32 : i32, i32
  }
  func.func @transform_2(%arg0: i32, %arg1: i32) -> (i32, i32) {
    %c0_i32 = arith.constant 0 : i32
    %c0_i32_0 = arith.constant 0 : i32
    return %arg0, %c0_i32 : i32, i32
  }
  func.func @transform_3(%arg0: i32, %arg1: i32) -> (i32, i32) {
    %c0_i32 = arith.constant 0 : i32
    %c0_i32_0 = arith.constant 0 : i32
    return %arg0, %c0_i32 : i32, i32
  }
  func.func @transform_4(%arg0: i32, %arg1: i32) -> (i32, i32) {
    %c0_i32 = arith.constant 0 : i32
    %c0_i32_0 = arith.constant 0 : i32
    %c0_i32_1 = arith.constant 0 : i32
    return %c0_i32, %c0_i32_0 : i32, i32
  }
  func.func @transform_5(%arg0: i32, %arg1: i32) -> (i32, i32) {
    %c0_i32 = arith.constant 0 : i32
    %c0_i32_0 = arith.constant 0 : i32
    %c0_i32_1 = arith.constant 0 : i32
    return %c0_i32, %c0_i32_0 : i32, i32
  }
  func.func @transform_6(%arg0: i32, %arg1: i32) -> (i32, i32) {
    %c0_i32 = arith.constant 0 : i32
    %c0_i32_0 = arith.constant 0 : i32
    return %arg0, %c0_i32 : i32, i32
  }
}

</mosaic_0001>

<llo_original>
// kernel: tpu_custom_call.1
$region0: #{tpu_custom_call.1}
  #allocation0 [shape = 'u32[]', space=smem, size = 0x4, offset = 0x4, fixed_abs, tag = 'smem constant byte address 0x4 - core index']
  #allocation1 [shape = 'u32[144,128]{1,0:T(1,128)}', space=vmem, size = 0x12000, scoped, tag = 'internal scratch']
  #allocation2 [shape = 'f32[128,128]{1,0:T(8,128)}', space=vmem, size = 0x10000, scoped, tag = 'scratch operand']
  %s0 = inlined_call_operand.hbm [shape: bf16[128,128], index: 0, kind: input, shape index: {}]
  %s1 = inlined_call_operand.vmem [shape: f32[128,128], index: 1, kind: input, shape index: {}]
  %s2 = inlined_call_operand.hbm [shape: f32[128,128], index: 2, kind: input, shape index: {}]
  %s3 = inlined_call_operand.vmem [shape: f32[128,1], index: 3, kind: input, shape index: {}]
  %s4 = inlined_call_operand.hbm [shape: f32[256,128], index: 4, kind: input, shape index: {}]
  %s5 = inlined_call_operand.vmem [shape: f32[1,128], index: 5, kind: input, shape index: {}]
  %s6 = inlined_call_operand.hbm [shape: f32[128,128], index: 6, kind: output, shape index: {}]
  %s7 = sld [smem:[#allocation0]]
  $region54: #{tpu_custom_call.1} parent=0
    _
  %s9 = ssub.s32 1, %s7
  %s10 = scalar_select 0, %s9, %s7
  $region1: #{tpu_custom_call.1} parent=0
    #allocation3 [shape = 'u8[32768]{0}', space=vmem, size = 0x8000, scoped, tag = 'input window, operand 0, single buffered']
    #allocation4 [shape = 's32[1]{0}', space=sflag, size = 0x4, scoped, tag = 'scoped memory for tpu_custom_call.1']
    #allocation5 [shape = 's32[1]{0}', space=sflag, size = 0x4, scoped, tag = 'scoped memory for tpu_custom_call.1']
    #allocation6 [shape = 'u8[65536]{0}', space=vmem, size = 0x10000, scoped, tag = 'input window, operand 2, single buffered']
    #allocation7 [shape = 's32[1]{0}', space=sflag, size = 0x4, scoped, tag = 'scoped memory for tpu_custom_call.1']
    #allocation8 [shape = 'u8[131072]{0}', space=vmem, size = 0x20000, scoped, tag = 'input window, operand 4, single buffered']
    #allocation9 [shape = 'u8[65536]{0}', space=vmem, size = 0x10000, scoped, tag = 'output window, operand 0, single buffered']
    %11 = vsyncpa [#allocation4], 0
    %12 = vsyncpa [#allocation7], 0
    %13 = vsyncpa [#allocation5], 0
    // Predicated region
    $region2: #{tpu_custom_call.1} parent=1 // pred_check
      _
    $region3: #{tpu_custom_call.1} parent=1 // pred_check_branch
      %15 = sbr.rel (0) target = $region5
    $region4: #{tpu_custom_call.1} parent=1 // pred_region
      %s17 = ssub.s32 1024, 1024
      %18 = vsyncadd [#allocation4], %s17
      %s19 = sshll.u32 [#allocation3], 4
      %s20 = int_to_ptr.vmem [resolvable:$true] %s19
      %25 = dma.hbm_to_vmem [thread:$0]  %s0, 1024, %s20, [#allocation4], 64, 64, 4
    $region5: #{tpu_custom_call.1} parent=1 // pred_fallthru
      _
    // Predicated region
    $region6: #{tpu_custom_call.1} parent=1 // pred_check
      _
    $region7: #{tpu_custom_call.1} parent=1 // pred_check_branch
      %27 = sbr.rel (0) target = $region9
    $region8: #{tpu_custom_call.1} parent=1 // pred_region
      _
    $region9: #{tpu_custom_call.1} parent=1 // pred_fallthru
      _
    // Predicated region
    $region10: #{tpu_custom_call.1} parent=1 // pred_check
      _
    $region11: #{tpu_custom_call.1} parent=1 // pred_check_branch
      %29 = sbr.rel (0) target = $region13
    $region12: #{tpu_custom_call.1} parent=1 // pred_region
      %s31 = ssub.s32 2048, 2048
      %32 = vsyncadd [#allocation7], %s31
      %s33 = sshll.u32 [#allocation6], 4
      %s34 = int_to_ptr.vmem [resolvable:$true] %s33
      %39 = dma.hbm_to_vmem [thread:$0]  %s2, 2048, %s34, [#allocation7], 128, 128, 8
    $region13: #{tpu_custom_call.1} parent=1 // pred_fallthru
      _
    // Predicated region
    $region14: #{tpu_custom_call.1} parent=1 // pred_check
      _
    $region15: #{tpu_custom_call.1} parent=1 // pred_check_branch
      %41 = sbr.rel (0) target = $region17
    $region16: #{tpu_custom_call.1} parent=1 // pred_region
      _
    $region17: #{tpu_custom_call.1} parent=1 // pred_fallthru
      _
    // Predicated region
    $region18: #{tpu_custom_call.1} parent=1 // pred_check
      _
    $region19: #{tpu_custom_call.1} parent=1 // pred_check_branch
      %43 = sbr.rel (0) target = $region21
    $region20: #{tpu_custom_call.1} parent=1 // pred_region
      %s45 = ssub.s32 4096, 4096
      %46 = vsyncadd [#allocation7], %s45
      %s47 = sshll.u32 [#allocation8], 4
      %s48 = int_to_ptr.vmem [resolvable:$true] %s47
      %53 = dma.hbm_to_vmem [thread:$0]  %s4, 4096, %s48, [#allocation7], 128, 128, 8
    $region21: #{tpu_custom_call.1} parent=1 // pred_fallthru
      _
    // Predicated region
    $region22: #{tpu_custom_call.1} parent=1 // pred_check
      _
    $region23: #{tpu_custom_call.1} parent=1 // pred_check_branch
      %55 = sbr.rel (0) target = $region25
    $region24: #{tpu_custom_call.1} parent=1 // pred_region
      _
    $region25: #{tpu_custom_call.1} parent=1 // pred_fallthru
      _
    // Predicated region
    $region26: #{tpu_custom_call.1} parent=1 // pred_check
      _
    $region27: #{tpu_custom_call.1} parent=1 // pred_check_branch
      %57 = sbr.rel (0) target = $region29
    $region28: #{tpu_custom_call.1} parent=1 // pred_region
      %58 = dma.done [#allocation4], 1024
    $region29: #{tpu_custom_call.1} parent=1 // pred_fallthru
      _
    // Predicated region
    $region30: #{tpu_custom_call.1} parent=1 // pred_check
      _
    $region31: #{tpu_custom_call.1} parent=1 // pred_check_branch
      %60 = sbr.rel (0) target = $region33
    $region32: #{tpu_custom_call.1} parent=1 // pred_region
      %61 = dma.done [#allocation7], 2048
    $region33: #{tpu_custom_call.1} parent=1 // pred_fallthru
      _
    // Predicated region
    $region34: #{tpu_custom_call.1} parent=1 // pred_check
      _
    $region35: #{tpu_custom_call.1} parent=1 // pred_check_branch
      %63 = sbr.rel (0) target = $region37
    $region36: #{tpu_custom_call.1} parent=1 // pred_region
      %64 = dma.done [#allocation7], 4096
    $region37: #{tpu_custom_call.1} parent=1 // pred_fallthru
      _
    %p65 = scmp.eq.s32.totalorder 0, 0
    // Predicated region
    $region38: #{tpu_custom_call.1} parent=1 // pred_check
      %p66 = pneg %p65
    $region39: #{tpu_custom_call.1} parent=1 // pred_check_branch
      %68 = sbr.rel (%p66) target = $region41
    $region40: #{tpu_custom_call.1} parent=1 // pred_region
      %69 = vst [vmem:[#allocation2] sm:$0xff] 0.0
      %70 = vst [vmem:[#allocation2 + $0x8] sm:$0xff] 0.0
      %71 = vst [vmem:[#allocation2 + $0x10] sm:$0xff] 0.0
      %72 = vst [vmem:[#allocation2 + $0x18] sm:$0xff] 0.0
      %73 = vst [vmem:[#allocation2 + $0x20] sm:$0xff] 0.0
      %74 = vst [vmem:[#allocation2 + $0x28] sm:$0xff] 0.0
      %75 = vst [vmem:[#allocation2 + $0x30] sm:$0xff] 0.0
      %76 = vst [vmem:[#allocation2 + $0x38] sm:$0xff] 0.0
      %77 = vst [vmem:[#allocation2 + $0x40] sm:$0xff] 0.0
      %78 = vst [vmem:[#allocation2 + $0x48] sm:$0xff] 0.0
      %79 = vst [vmem:[#allocation2 + $0x50] sm:$0xff] 0.0
      %80 = vst [vmem:[#allocation2 + $0x58] sm:$0xff] 0.0
      %81 = vst [vmem:[#allocation2 + $0x60] sm:$0xff] 0.0
      %82 = vst [vmem:[#allocation2 + $0x68] sm:$0xff] 0.0
      %83 = vst [vmem:[#allocation2 + $0x70] sm:$0xff] 0.0
      %84 = vst [vmem:[#allocation2 + $0x78] sm:$0xff] 0.0
    $region41: #{tpu_custom_call.1} parent=1 // pred_fallthru
      _
    %v85 = vld [vmem:[#allocation3] sm:$0xf]
    %v86 = vld [vmem:[#allocation3 + $0x4] sm:$0xf]
    %v87 = vld [vmem:[#allocation3 + $0x8] sm:$0xf]
    %v88 = vld [vmem:[#allocation3 + $0xc] sm:$0xf]
    %v89 = vld [vmem:[#allocation3 + $0x10] sm:$0xf]
    %v90 = vld [vmem:[#allocation3 + $0x14] sm:$0xf]
    %v91 = vld [vmem:[#allocation3 + $0x18] sm:$0xf]
    %v92 = vld [vmem:[#allocation3 + $0x1c] sm:$0xf]
    %v93 = vld [vmem:[#allocation3 + $0x20] sm:$0xf]
    %v94 = vld [vmem:[#allocation3 + $0x24] sm:$0xf]
    %v95 = vld [vmem:[#allocation3 + $0x28] sm:$0xf]
    %v96 = vld [vmem:[#allocation3 + $0x2c] sm:$0xf]
    %v97 = vld [vmem:[#allocation3 + $0x30] sm:$0xf]
    %v98 = vld [vmem:[#allocation3 + $0x34] sm:$0xf]
    %v99 = vld [vmem:[#allocation3 + $0x38] sm:$0xf]
    %v100 = vld [vmem:[#allocation3 + $0x3c] sm:$0xf]
    %v101 = vunpack.c.l.bf16 %v85
    %v102 = vunpack.c.l.bf16 %v86
    %v103 = vunpack.c.l.bf16 %v87
    %v104 = vunpack.c.l.bf16 %v88
    %v105 = vunpack.c.l.bf16 %v89
    %v106 = vunpack.c.l.bf16 %v90
    %v107 = vunpack.c.l.bf16 %v91
    %v108 = vunpack.c.l.bf16 %v92
    %v109 = vunpack.c.l.bf16 %v93
    %v110 = vunpack.c.l.bf16 %v94
    %v111 = vunpack.c.l.bf16 %v95
    %v112 = vunpack.c.l.bf16 %v96
    %v113 = vunpack.c.l.bf16 %v97
    %v114 = vunpack.c.l.bf16 %v98
    %v115 = vunpack.c.l.bf16 %v99
    %v116 = vunpack.c.l.bf16 %v100
    %v117 = vld [vmem:[#allocation2] sm:$0xff]
    %v118 = vld [vmem:[#allocation2 + $0x8] sm:$0xff]
    %v119 = vld [vmem:[#allocation2 + $0x10] sm:$0xff]
    %v120 = vld [vmem:[#allocation2 + $0x18] sm:$0xff]
    %v121 = vld [vmem:[#allocation2 + $0x20] sm:$0xff]
    %v122 = vld [vmem:[#allocation2 + $0x28] sm:$0xff]
    %v123 = vld [vmem:[#allocation2 + $0x30] sm:$0xff]
    %v124 = vld [vmem:[#allocation2 + $0x38] sm:$0xff]
    %v125 = vld [vmem:[#allocation2 + $0x40] sm:$0xff]
    %v126 = vld [vmem:[#allocation2 + $0x48] sm:$0xff]
    %v127 = vld [vmem:[#allocation2 + $0x50] sm:$0xff]
    %v128 = vld [vmem:[#allocation2 + $0x58] sm:$0xff]
    %v129 = vld [vmem:[#allocation2 + $0x60] sm:$0xff]
    %v130 = vld [vmem:[#allocation2 + $0x68] sm:$0xff]
    %v131 = vld [vmem:[#allocation2 + $0x70] sm:$0xff]
    %v132 = vld [vmem:[#allocation2 + $0x78] sm:$0xff]
    %v133 = vld [vmem:[%s1] sm:$0xff]
    %v134 = vld [vmem:[%s1 + $0x8] sm:$0xff]
    %v135 = vld [vmem:[%s1 + $0x10] sm:$0xff]
    %v136 = vld [vmem:[%s1 + $0x18] sm:$0xff]
    %v137 = vld [vmem:[%s1 + $0x20] sm:$0xff]
    %v138 = vld [vmem:[%s1 + $0x28] sm:$0xff]
    %v139 = vld [vmem:[%s1 + $0x30] sm:$0xff]
    %v140 = vld [vmem:[%s1 + $0x38] sm:$0xff]
    %v141 = vld [vmem:[%s1 + $0x40] sm:$0xff]
    %v142 = vld [vmem:[%s1 + $0x48] sm:$0xff]
    %v143 = vld [vmem:[%s1 + $0x50] sm:$0xff]
    %v144 = vld [vmem:[%s1 + $0x58] sm:$0xff]
    %v145 = vld [vmem:[%s1 + $0x60] sm:$0xff]
    %v146 = vld [vmem:[%s1 + $0x68] sm:$0xff]
    %v147 = vld [vmem:[%s1 + $0x70] sm:$0xff]
    %v148 = vld [vmem:[%s1 + $0x78] sm:$0xff]
    %149 = vmatprep.subr.mxu0 0.0
    %150 = vmatpush1.msra.mxu0 %v133
    %151 = vmatprep.subr.mxu0 0.0
    %152 = vmatpush1.msra.mxu0 %v134
    %153 = vmatprep.subr.mxu0 0.0
    %154 = vmatpush1.msra.mxu0 %v135
    %155 = vmatprep.subr.mxu0 0.0
    %156 = vmatpush1.msra.mxu0 %v136
    %157 = vmatprep.subr.mxu0 0.0
    %158 = vmatpush1.msra.mxu0 %v137
    %159 = vmatprep.subr.mxu0 0.0
    %160 = vmatpush1.msra.mxu0 %v138
    %161 = vmatprep.subr.mxu0 0.0
    %162 = vmatpush1.msra.mxu0 %v139
    %163 = vmatprep.subr.mxu0 0.0
    %164 = vmatpush1.msra.mxu0 %v140
    %165 = vmatprep.subr.mxu0 0.0
    %166 = vmatpush1.msra.mxu0 %v141
    %167 = vmatprep.subr.mxu0 0.0
    %168 = vmatpush1.msra.mxu0 %v142
    %169 = vmatprep.subr.mxu0 0.0
    %170 = vmatpush1.msra.mxu0 %v143
    %171 = vmatprep.subr.mxu0 0.0
    %172 = vmatpush1.msra.mxu0 %v144
    %173 = vmatprep.subr.mxu0 0.0
    %174 = vmatpush1.msra.mxu0 %v145
    %175 = vmatprep.subr.mxu0 0.0
    %176 = vmatpush1.msra.mxu0 %v146
    %177 = vmatprep.subr.mxu0 0.0
    %178 = vmatpush1.msra.mxu0 %v147
    %179 = vmatprep.subr.mxu0 0.0
    %180 = vmatpush1.msra.mxu0 %v148
    %181 = vmatprep.subr.mxu0 0.0
    %182 = vmatpush1.msra.mxu0 0.0
    %183 = vmatprep.subr.mxu0 0.0
    %184 = vmatpush1.msra.mxu0 0.0
    %185 = vmatprep.subr.mxu0 0.0
    %186 = vmatpush1.msra.mxu0 0.0
    %187 = vmatprep.subr.mxu0 0.0
    %188 = vmatpush1.msra.mxu0 0.0
    %189 = vmatprep.subr.mxu0 0.0
    %190 = vmatpush1.msra.mxu0 0.0
    %191 = vmatprep.subr.mxu0 0.0
    %192 = vmatpush1.msra.mxu0 0.0
    %193 = vmatprep.subr.mxu0 0.0
    %194 = vmatpush1.msra.mxu0 0.0
    %195 = vmatprep.subr.mxu0 0.0
    %196 = vmatpush1.msra.mxu0 0.0
    %197 = vmatprep.subr.mxu0 0.0
    %198 = vmatpush1.msra.mxu0 0.0
    %199 = vmatprep.subr.mxu0 0.0
    %200 = vmatpush1.msra.mxu0 0.0
    %201 = vmatprep.subr.mxu0 0.0
    %202 = vmatpush1.msra.mxu0 0.0
    %203 = vmatprep.subr.mxu0 0.0
    %204 = vmatpush1.msra.mxu0 0.0
    %205 = vmatprep.subr.mxu0 0.0
    %206 = vmatpush1.msra.mxu0 0.0
    %207 = vmatprep.subr.mxu0 0.0
    %208 = vmatpush1.msra.mxu0 0.0
    %209 = vmatprep.subr.mxu0 0.0
    %210 = vmatpush1.msra.mxu0 0.0
    %211 = vmatprep.subr.mxu0 0.0
    %212 = vmatpush1.msra.mxu0 0.0
    %213 = vmatprep.mubr.f32.mxu0 0.0
    %214 = vmatmul.mubr.f32.gmra.mrb[0].mxu0 %v101
    %v215 = vpop.f32.mrb[0].mxu0
    %v216 = vadd.f32 0.0, %v215
    %v217 = vpop.f32.mrb[0].mxu0
    %218 = vmatprep.mubr.f32.mxu0 0.0
    %219 = vmatmul.mubr.f32.gmra.mrb[0].mxu0 %v102
    %v220 = vpop.f32.mrb[0].mxu0
    %v221 = vadd.f32 0.0, %v220
    %v222 = vpop.f32.mrb[0].mxu0
    %223 = vmatprep.mubr.f32.mxu0 0.0
    %224 = vmatmul.mubr.f32.gmra.mrb[0].mxu0 %v103
    %v225 = vpop.f32.mrb[0].mxu0
    %v226 = vadd.f32 0.0, %v225
    %v227 = vpop.f32.mrb[0].mxu0
    %228 = vmatprep.mubr.f32.mxu0 0.0
    %229 = vmatmul.mubr.f32.gmra.mrb[0].mxu0 %v104
    %v230 = vpop.f32.mrb[0].mxu0
    %v231 = vadd.f32 0.0, %v230
    %v232 = vpop.f32.mrb[0].mxu0
    %233 = vmatprep.mubr.f32.mxu0 0.0
    %234 = vmatmul.mubr.f32.gmra.mrb[0].mxu0 %v105
    %v235 = vpop.f32.mrb[0].mxu0
    %v236 = vadd.f32 0.0, %v235
    %v237 = vpop.f32.mrb[0].mxu0
    %238 = vmatprep.mubr.f32.mxu0 0.0
    %239 = vmatmul.mubr.f32.gmra.mrb[0].mxu0 %v106
    %v240 = vpop.f32.mrb[0].mxu0
    %v241 = vadd.f32 0.0, %v240
    %v242 = vpop.f32.mrb[0].mxu0
    %243 = vmatprep.mubr.f32.mxu0 0.0
    %244 = vmatmul.mubr.f32.gmra.mrb[0].mxu0 %v107
    %v245 = vpop.f32.mrb[0].mxu0
    %v246 = vadd.f32 0.0, %v245
    %v247 = vpop.f32.mrb[0].mxu0
    %248 = vmatprep.mubr.f32.mxu0 0.0
    %249 = vmatmul.mubr.f32.gmra.mrb[0].mxu0 %v108
    %v250 = vpop.f32.mrb[0].mxu0
    %v251 = vadd.f32 0.0, %v250
    %v252 = vpop.f32.mrb[0].mxu0
    %253 = vmatprep.mubr.f32.mxu0 0.0
    %254 = vmatmul.mubr.f32.gmra.mrb[0].mxu0 %v109
    %v255 = vpop.f32.mrb[0].mxu0
    %v256 = vadd.f32 0.0, %v255
    %v257 = vpop.f32.mrb[0].mxu0
    %258 = vmatprep.mubr.f32.mxu0 0.0
    %259 = vmatmul.mubr.f32.gmra.mrb[0].mxu0 %v110
    %v260 = vpop.f32.mrb[0].mxu0
    %v261 = vadd.f32 0.0, %v260
    %v262 = vpop.f32.mrb[0].mxu0
    %263 = vmatprep.mubr.f32.mxu0 0.0
    %264 = vmatmul.mubr.f32.gmra.mrb[0].mxu0 %v111
    %v265 = vpop.f32.mrb[0].mxu0
    %v266 = vadd.f32 0.0, %v265
    %v267 = vpop.f32.mrb[0].mxu0
    %268 = vmatprep.mubr.f32.mxu0 0.0
    %269 = vmatmul.mubr.f32.gmra.mrb[0].mxu0 %v112
    %v270 = vpop.f32.mrb[0].mxu0
    %v271 = vadd.f32 0.0, %v270
    %v272 = vpop.f32.mrb[0].mxu0
    %273 = vmatprep.mubr.f32.mxu0 0.0
    %274 = vmatmul.mubr.f32.gmra.mrb[0].mxu0 %v113
    %v275 = vpop.f32.mrb[0].mxu0
    %v276 = vadd.f32 0.0, %v275
    %v277 = vpop.f32.mrb[0].mxu0
    %278 = vmatprep.mubr.f32.mxu0 0.0
    %279 = vmatmul.mubr.f32.gmra.mrb[0].mxu0 %v114
    %v280 = vpop.f32.mrb[0].mxu0
    %v281 = vadd.f32 0.0, %v280
    %v282 = vpop.f32.mrb[0].mxu0
    %283 = vmatprep.mubr.f32.mxu0 0.0
    %284 = vmatmul.mubr.f32.gmra.mrb[0].mxu0 %v115
    %v285 = vpop.f32.mrb[0].mxu0
    %v286 = vadd.f32 0.0, %v285
    %v287 = vpop.f32.mrb[0].mxu0
    %288 = vmatprep.mubr.f32.mxu0 0.0
    %289 = vmatmul.mubr.f32.gmra.mrb[0].mxu0 %v116
    %v290 = vpop.f32.mrb[0].mxu0
    %v291 = vadd.f32 0.0, %v290
    %v292 = vpop.f32.mrb[0].mxu0
    %293 = vdwg.mxu0
    %v294 = vadd.f32 %v117, %v216
    %v295 = vadd.f32 %v118, %v221
    %v296 = vadd.f32 %v119, %v226
    %v297 = vadd.f32 %v120, %v231
    %v298 = vadd.f32 %v121, %v236
    %v299 = vadd.f32 %v122, %v241
    %v300 = vadd.f32 %v123, %v246
    %v301 = vadd.f32 %v124, %v251
    %v302 = vadd.f32 %v125, %v256
    %v303 = vadd.f32 %v126, %v261
    %v304 = vadd.f32 %v127, %v266
    %v305 = vadd.f32 %v128, %v271
    %v306 = vadd.f32 %v129, %v276
    %v307 = vadd.f32 %v130, %v281
    %v308 = vadd.f32 %v131, %v286
    %v309 = vadd.f32 %v132, %v291
    %310 = vst [vmem:[#allocation2] sm:$0xff] %v294
    %311 = vst [vmem:[#allocation2 + $0x8] sm:$0xff] %v295
    %312 = vst [vmem:[#allocation2 + $0x10] sm:$0xff] %v296
    %313 = vst [vmem:[#allocation2 + $0x18] sm:$0xff] %v297
    %314 = vst [vmem:[#allocation2 + $0x20] sm:$0xff] %v298
    %315 = vst [vmem:[#allocation2 + $0x28] sm:$0xff] %v299
    %316 = vst [vmem:[#allocation2 + $0x30] sm:$0xff] %v300
    %317 = vst [vmem:[#allocation2 + $0x38] sm:$0xff] %v301
    %318 = vst [vmem:[#allocation2 + $0x40] sm:$0xff] %v302
    %319 = vst [vmem:[#allocation2 + $0x48] sm:$0xff] %v303
    %320 = vst [vmem:[#allocation2 + $0x50] sm:$0xff] %v304
    %321 = vst [vmem:[#allocation2 + $0x58] sm:$0xff] %v305
    %322 = vst [vmem:[#allocation2 + $0x60] sm:$0xff] %v306
    %323 = vst [vmem:[#allocation2 + $0x68] sm:$0xff] %v307
    %324 = vst [vmem:[#allocation2 + $0x70] sm:$0xff] %v308
    %325 = vst [vmem:[#allocation2 + $0x78] sm:$0xff] %v309
    // Predicated region
    $region42: #{tpu_custom_call.1} parent=1 // pred_check
      %p326 = pneg %p65
    $region43: #{tpu_custom_call.1} parent=1 // pred_check_branch
      %328 = sbr.rel (%p326) target = $region45
    $region44: #{tpu_custom_call.1} parent=1 // pred_region
      %v329 = vld [vmem:[#allocation2] sm:$0xff]
      %v330 = vld [vmem:[#allocation2 + $0x8] sm:$0xff]
      %v331 = vld [vmem:[#allocation2 + $0x10] sm:$0xff]
      %v332 = vld [vmem:[#allocation2 + $0x18] sm:$0xff]
      %v333 = vld [vmem:[#allocation2 + $0x20] sm:$0xff]
      %v334 = vld [vmem:[#allocation2 + $0x28] sm:$0xff]
      %v335 = vld [vmem:[#allocation2 + $0x30] sm:$0xff]
      %v336 = vld [vmem:[#allocation2 + $0x38] sm:$0xff]
      %v337 = vld [vmem:[#allocation2 + $0x40] sm:$0xff]
      %v338 = vld [vmem:[#allocation2 + $0x48] sm:$0xff]
      %v339 = vld [vmem:[#allocation2 + $0x50] sm:$0xff]
      %v340 = vld [vmem:[#allocation2 + $0x58] sm:$0xff]
      %v341 = vld [vmem:[#allocation2 + $0x60] sm:$0xff]
      %v342 = vld [vmem:[#allocation2 + $0x68] sm:$0xff]
      %v343 = vld [vmem:[#allocation2 + $0x70] sm:$0xff]
      %v344 = vld [vmem:[#allocation2 + $0x78] sm:$0xff]
      %v345 = vld [vmem:[%s3] sm:$0xff]
      %v346 = vld [vmem:[%s3 + $0x8] sm:$0xff]
      %v347 = vld [vmem:[%s3 + $0x10] sm:$0xff]
      %v348 = vld [vmem:[%s3 + $0x18] sm:$0xff]
      %v349 = vld [vmem:[%s3 + $0x20] sm:$0xff]
      %v350 = vld [vmem:[%s3 + $0x28] sm:$0xff]
      %v351 = vld [vmem:[%s3 + $0x30] sm:$0xff]
      %v352 = vld [vmem:[%s3 + $0x38] sm:$0xff]
      %v353 = vld [vmem:[%s3 + $0x40] sm:$0xff]
      %v354 = vld [vmem:[%s3 + $0x48] sm:$0xff]
      %v355 = vld [vmem:[%s3 + $0x50] sm:$0xff]
      %v356 = vld [vmem:[%s3 + $0x58] sm:$0xff]
      %v357 = vld [vmem:[%s3 + $0x60] sm:$0xff]
      %v358 = vld [vmem:[%s3 + $0x68] sm:$0xff]
      %v359 = vld [vmem:[%s3 + $0x70] sm:$0xff]
      %v360 = vld [vmem:[%s3 + $0x78] sm:$0xff]
      %362 = vset.pattern.permute.xlu0 0
      %363 = vperm.xlu0 %362, %v345
      %v364 = vpop.permute.xlu0 %363
      %367 = vset.pattern.permute.xlu0 0
      %368 = vperm.xlu0 %367, %v346
      %v369 = vpop.permute.xlu0 %368
      %372 = vset.pattern.permute.xlu0 0
      %373 = vperm.xlu0 %372, %v347
      %v374 = vpop.permute.xlu0 %373
      %377 = vset.pattern.permute.xlu0 0
      %378 = vperm.xlu0 %377, %v348
      %v379 = vpop.permute.xlu0 %378
      %382 = vset.pattern.permute.xlu0 0
      %383 = vperm.xlu0 %382, %v349
      %v384 = vpop.permute.xlu0 %383
      %387 = vset.pattern.permute.xlu0 0
      %388 = vperm.xlu0 %387, %v350
      %v389 = vpop.permute.xlu0 %388
      %392 = vset.pattern.permute.xlu0 0
      %393 = vperm.xlu0 %392, %v351
      %v394 = vpop.permute.xlu0 %393
      %397 = vset.pattern.permute.xlu0 0
      %398 = vperm.xlu0 %397, %v352
      %v399 = vpop.permute.xlu0 %398
      %402 = vset.pattern.permute.xlu0 0
      %403 = vperm.xlu0 %402, %v353
      %v404 = vpop.permute.xlu0 %403
      %407 = vset.pattern.permute.xlu0 0
      %408 = vperm.xlu0 %407, %v354
      %v409 = vpop.permute.xlu0 %408
      %412 = vset.pattern.permute.xlu0 0
      %413 = vperm.xlu0 %412, %v355
      %v414 = vpop.permute.xlu0 %413
      %417 = vset.pattern.permute.xlu0 0
      %418 = vperm.xlu0 %417, %v356
      %v419 = vpop.permute.xlu0 %418
      %422 = vset.pattern.permute.xlu0 0
      %423 = vperm.xlu0 %422, %v357
      %v424 = vpop.permute.xlu0 %423
      %427 = vset.pattern.permute.xlu0 0
      %428 = vperm.xlu0 %427, %v358
      %v429 = vpop.permute.xlu0 %428
      %432 = vset.pattern.permute.xlu0 0
      %433 = vperm.xlu0 %432, %v359
      %v434 = vpop.permute.xlu0 %433
      %437 = vset.pattern.permute.xlu0 0
      %438 = vperm.xlu0 %437, %v360
      %v439 = vpop.permute.xlu0 %438
      %v441 = vmul.f32 %v329, %v364
      %v442 = vmul.f32 %v330, %v369
      %v443 = vmul.f32 %v331, %v374
      %v444 = vmul.f32 %v332, %v379
      %v445 = vmul.f32 %v333, %v384
      %v446 = vmul.f32 %v334, %v389
      %v447 = vmul.f32 %v335, %v394
      %v448 = vmul.f32 %v336, %v399
      %v449 = vmul.f32 %v337, %v404
      %v450 = vmul.f32 %v338, %v409
      %v451 = vmul.f32 %v339, %v414
      %v452 = vmul.f32 %v340, %v419
      %v453 = vmul.f32 %v341, %v424
      %v454 = vmul.f32 %v342, %v429
      %v455 = vmul.f32 %v343, %v434
      %v456 = vmul.f32 %v344, %v439
      %v457 = vld [vmem:[#allocation6] sm:$0xff]
      %v458 = vld [vmem:[#allocation6 + $0x8] sm:$0xff]
      %v459 = vld [vmem:[#allocation6 + $0x10] sm:$0xff]
      %v460 = vld [vmem:[#allocation6 + $0x18] sm:$0xff]
      %v461 = vld [vmem:[#allocation6 + $0x20] sm:$0xff]
      %v462 = vld [vmem:[#allocation6 + $0x28] sm:$0xff]
      %v463 = vld [vmem:[#allocation6 + $0x30] sm:$0xff]
      %v464 = vld [vmem:[#allocation6 + $0x38] sm:$0xff]
      %v465 = vld [vmem:[#allocation6 + $0x40] sm:$0xff]
      %v466 = vld [vmem:[#allocation6 + $0x48] sm:$0xff]
      %v467 = vld [vmem:[#allocation6 + $0x50] sm:$0xff]
      %v468 = vld [vmem:[#allocation6 + $0x58] sm:$0xff]
      %v469 = vld [vmem:[#allocation6 + $0x60] sm:$0xff]
      %v470 = vld [vmem:[#allocation6 + $0x68] sm:$0xff]
      %v471 = vld [vmem:[#allocation6 + $0x70] sm:$0xff]
      %v472 = vld [vmem:[#allocation6 + $0x78] sm:$0xff]
      %v473 = vld [vmem:[#allocation8] sm:$0xff]
      %v474 = vld [vmem:[#allocation8 + $0x8] sm:$0xff]
      %v475 = vld [vmem:[#allocation8 + $0x10] sm:$0xff]
      %v476 = vld [vmem:[#allocation8 + $0x18] sm:$0xff]
      %v477 = vld [vmem:[#allocation8 + $0x20] sm:$0xff]
      %v478 = vld [vmem:[#allocation8 + $0x28] sm:$0xff]
      %v479 = vld [vmem:[#allocation8 + $0x30] sm:$0xff]
      %v480 = vld [vmem:[#allocation8 + $0x38] sm:$0xff]
      %v481 = vld [vmem:[#allocation8 + $0x40] sm:$0xff]
      %v482 = vld [vmem:[#allocation8 + $0x48] sm:$0xff]
      %v483 = vld [vmem:[#allocation8 + $0x50] sm:$0xff]
      %v484 = vld [vmem:[#allocation8 + $0x58] sm:$0xff]
      %v485 = vld [vmem:[#allocation8 + $0x60] sm:$0xff]
      %v486 = vld [vmem:[#allocation8 + $0x68] sm:$0xff]
      %v487 = vld [vmem:[#allocation8 + $0x70] sm:$0xff]
      %v488 = vld [vmem:[#allocation8 + $0x78] sm:$0xff]
      %v489 = vld [vmem:[#allocation8 + $0x80] sm:$0xff]
      %v490 = vld [vmem:[#allocation8 + $0x88] sm:$0xff]
      %v491 = vld [vmem:[#allocation8 + $0x90] sm:$0xff]
      %v492 = vld [vmem:[#allocation8 + $0x98] sm:$0xff]
      %v493 = vld [vmem:[#allocation8 + $0xa0] sm:$0xff]
      %v494 = vld [vmem:[#allocation8 + $0xa8] sm:$0xff]
      %v495 = vld [vmem:[#allocation8 + $0xb0] sm:$0xff]
      %v496 = vld [vmem:[#allocation8 + $0xb8] sm:$0xff]
      %v497 = vld [vmem:[#allocation8 + $0xc0] sm:$0xff]
      %v498 = vld [vmem:[#allocation8 + $0xc8] sm:$0xff]
      %v499 = vld [vmem:[#allocation8 + $0xd0] sm:$0xff]
      %v500 = vld [vmem:[#allocation8 + $0xd8] sm:$0xff]
      %v501 = vld [vmem:[#allocation8 + $0xe0] sm:$0xff]
      %v502 = vld [vmem:[#allocation8 + $0xe8] sm:$0xff]
      %v503 = vld [vmem:[#allocation8 + $0xf0] sm:$0xff]
      %v504 = vld [vmem:[#allocation8 + $0xf8] sm:$0xff]
      %v505 = vld [vmem:[%s5] sm:$0x1]
      %v507 = vlaneseq
      %v508 = vshrl.u32 %v507, 7
      %v509 = vsub.s32 0, %v508
      %v510 = vrot.slane %v505, %v509
      %512 = vmatprep.subr.mxu0 0.0
      %513 = vmatpush1.msra.mxu0 %v473
      %514 = vmatprep.subr.mxu0 0.0
      %515 = vmatpush1.msra.mxu0 %v474
      %516 = vmatprep.subr.mxu0 0.0
      %517 = vmatpush1.msra.mxu0 %v475
      %518 = vmatprep.subr.mxu0 0.0
      %519 = vmatpush1.msra.mxu0 %v476
      %520 = vmatprep.subr.mxu0 0.0
      %521 = vmatpush1.msra.mxu0 %v477
      %522 = vmatprep.subr.mxu0 0.0
      %523 = vmatpush1.msra.mxu0 %v478
      %524 = vmatprep.subr.mxu0 0.0
      %525 = vmatpush1.msra.mxu0 %v479
      %526 = vmatprep.subr.mxu0 0.0
      %527 = vmatpush1.msra.mxu0 %v480
      %528 = vmatprep.subr.mxu0 0.0
      %529 = vmatpush1.msra.mxu0 %v481
      %530 = vmatprep.subr.mxu0 0.0
      %531 = vmatpush1.msra.mxu0 %v482
      %532 = vmatprep.subr.mxu0 0.0
      %533 = vmatpush1.msra.mxu0 %v483
      %534 = vmatprep.subr.mxu0 0.0
      %535 = vmatpush1.msra.mxu0 %v484
      %536 = vmatprep.subr.mxu0 0.0
      %537 = vmatpush1.msra.mxu0 %v485
      %538 = vmatprep.subr.mxu0 0.0
      %539 = vmatpush1.msra.mxu0 %v486
      %540 = vmatprep.subr.mxu0 0.0
      %541 = vmatpush1.msra.mxu0 %v487
      %542 = vmatprep.subr.mxu0 0.0
      %543 = vmatpush1.msra.mxu0 %v488
      %544 = vmatprep.subr.mxu0 0.0
      %545 = vmatpush1.msra.mxu0 %v489
      %546 = vmatprep.subr.mxu0 0.0
      %547 = vmatpush1.msra.mxu0 %v490
      %548 = vmatprep.subr.mxu0 0.0
      %549 = vmatpush1.msra.mxu0 %v491
      %550 = vmatprep.subr.mxu0 0.0
      %551 = vmatpush1.msra.mxu0 %v492
      %552 = vmatprep.subr.mxu0 0.0
      %553 = vmatpush1.msra.mxu0 %v493
      %554 = vmatprep.subr.mxu0 0.0
      %555 = vmatpush1.msra.mxu0 %v494
      %556 = vmatprep.subr.mxu0 0.0
      %557 = vmatpush1.msra.mxu0 %v495
      %558 = vmatprep.subr.mxu0 0.0
      %559 = vmatpush1.msra.mxu0 %v496
      %560 = vmatprep.subr.mxu0 0.0
      %561 = vmatpush1.msra.mxu0 %v497
      %562 = vmatprep.subr.mxu0 0.0
      %563 = vmatpush1.msra.mxu0 %v498
      %564 = vmatprep.subr.mxu0 0.0
      %565 = vmatpush1.msra.mxu0 %v499
      %566 = vmatprep.subr.mxu0 0.0
      %567 = vmatpush1.msra.mxu0 %v500
      %568 = vmatprep.subr.mxu0 0.0
      %569 = vmatpush1.msra.mxu0 %v501
      %570 = vmatprep.subr.mxu0 0.0
      %571 = vmatpush1.msra.mxu0 %v502
      %572 = vmatprep.subr.mxu0 0.0
      %573 = vmatpush1.msra.mxu0 %v503
      %574 = vmatprep.subr.mxu0 0.0
      %575 = vmatpush1.msra.mxu0 %v504
      %576 = vmatprep.mubr.f32.mxu0 %v457
      %577 = vmatmul.mubr.f32.gmra.mrb[0].mxu0 %v441
      %v578 = vpop.f32.mrb[0].mxu0
      %v579 = vadd.f32 %v510, %v578
      %v580 = vpop.f32.mrb[0].mxu0
      %581 = vmatprep.mubr.f32.mxu0 %v458
      %582 = vmatmul.mubr.f32.gmra.mrb[0].mxu0 %v442
      %v583 = vpop.f32.mrb[0].mxu0
      %v584 = vadd.f32 %v510, %v583
      %v585 = vpop.f32.mrb[0].mxu0
      %586 = vmatprep.mubr.f32.mxu0 %v459
      %587 = vmatmul.mubr.f32.gmra.mrb[0].mxu0 %v443
      %v588 = vpop.f32.mrb[0].mxu0
      %v589 = vadd.f32 %v510, %v588
      %v590 = vpop.f32.mrb[0].mxu0
      %591 = vmatprep.mubr.f32.mxu0 %v460
      %592 = vmatmul.mubr.f32.gmra.mrb[0].mxu0 %v444
      %v593 = vpop.f32.mrb[0].mxu0
      %v594 = vadd.f32 %v510, %v593
      %v595 = vpop.f32.mrb[0].mxu0
      %596 = vmatprep.mubr.f32.mxu0 %v461
      %597 = vmatmul.mubr.f32.gmra.mrb[0].mxu0 %v445
      %v598 = vpop.f32.mrb[0].mxu0
      %v599 = vadd.f32 %v510, %v598
      %v600 = vpop.f32.mrb[0].mxu0
      %601 = vmatprep.mubr.f32.mxu0 %v462
      %602 = vmatmul.mubr.f32.gmra.mrb[0].mxu0 %v446
      %v603 = vpop.f32.mrb[0].mxu0
      %v604 = vadd.f32 %v510, %v603
      %v605 = vpop.f32.mrb[0].mxu0
      %606 = vmatprep.mubr.f32.mxu0 %v463
      %607 = vmatmul.mubr.f32.gmra.mrb[0].mxu0 %v447
      %v608 = vpop.f32.mrb[0].mxu0
      %v609 = vadd.f32 %v510, %v608
      %v610 = vpop.f32.mrb[0].mxu0
      %611 = vmatprep.mubr.f32.mxu0 %v464
      %612 = vmatmul.mubr.f32.gmra.mrb[0].mxu0 %v448
      %v613 = vpop.f32.mrb[0].mxu0
      %v614 = vadd.f32 %v510, %v613
      %v615 = vpop.f32.mrb[0].mxu0
      %616 = vmatprep.mubr.f32.mxu0 %v465
      %617 = vmatmul.mubr.f32.gmra.mrb[0].mxu0 %v449
      %v618 = vpop.f32.mrb[0].mxu0
      %v619 = vadd.f32 %v510, %v618
      %v620 = vpop.f32.mrb[0].mxu0
      %621 = vmatprep.mubr.f32.mxu0 %v466
      %622 = vmatmul.mubr.f32.gmra.mrb[0].mxu0 %v450
      %v623 = vpop.f32.mrb[0].mxu0
      %v624 = vadd.f32 %v510, %v623
      %v625 = vpop.f32.mrb[0].mxu0
      %626 = vmatprep.mubr.f32.mxu0 %v467
      %627 = vmatmul.mubr.f32.gmra.mrb[0].mxu0 %v451
      %v628 = vpop.f32.mrb[0].mxu0
      %v629 = vadd.f32 %v510, %v628
      %v630 = vpop.f32.mrb[0].mxu0
      %631 = vmatprep.mubr.f32.mxu0 %v468
      %632 = vmatmul.mubr.f32.gmra.mrb[0].mxu0 %v452
      %v633 = vpop.f32.mrb[0].mxu0
      %v634 = vadd.f32 %v510, %v633
      %v635 = vpop.f32.mrb[0].mxu0
      %636 = vmatprep.mubr.f32.mxu0 %v469
      %637 = vmatmul.mubr.f32.gmra.mrb[0].mxu0 %v453
      %v638 = vpop.f32.mrb[0].mxu0
      %v639 = vadd.f32 %v510, %v638
      %v640 = vpop.f32.mrb[0].mxu0
      %641 = vmatprep.mubr.f32.mxu0 %v470
      %642 = vmatmul.mubr.f32.gmra.mrb[0].mxu0 %v454
      %v643 = vpop.f32.mrb[0].mxu0
      %v644 = vadd.f32 %v510, %v643
      %v645 = vpop.f32.mrb[0].mxu0
      %646 = vmatprep.mubr.f32.mxu0 %v471
      %647 = vmatmul.mubr.f32.gmra.mrb[0].mxu0 %v455
      %v648 = vpop.f32.mrb[0].mxu0
      %v649 = vadd.f32 %v510, %v648
      %v650 = vpop.f32.mrb[0].mxu0
      %651 = vmatprep.mubr.f32.mxu0 %v472
      %652 = vmatmul.mubr.f32.gmra.mrb[0].mxu0 %v456
      %v653 = vpop.f32.mrb[0].mxu0
      %v654 = vadd.f32 %v510, %v653
      %v655 = vpop.f32.mrb[0].mxu0
      %656 = vdwg.mxu0
      %v657 = vmax.f32 %v579, 0.0
      %v658 = vmax.f32 %v584, 0.0
      %v659 = vmax.f32 %v589, 0.0
      %v660 = vmax.f32 %v594, 0.0
      %v661 = vmax.f32 %v599, 0.0
      %v662 = vmax.f32 %v604, 0.0
      %v663 = vmax.f32 %v609, 0.0
      %v664 = vmax.f32 %v614, 0.0
      %v665 = vmax.f32 %v619, 0.0
      %v666 = vmax.f32 %v624, 0.0
      %v667 = vmax.f32 %v629, 0.0
      %v668 = vmax.f32 %v634, 0.0
      %v669 = vmax.f32 %v639, 0.0
      %v670 = vmax.f32 %v644, 0.0
      %v671 = vmax.f32 %v649, 0.0
      %v672 = vmax.f32 %v654, 0.0
      %673 = vst [vmem:[#allocation9] sm:$0xff] %v657
      %674 = vst [vmem:[#allocation9 + $0x8] sm:$0xff] %v658
      %675 = vst [vmem:[#allocation9 + $0x10] sm:$0xff] %v659
      %676 = vst [vmem:[#allocation9 + $0x18] sm:$0xff] %v660
      %677 = vst [vmem:[#allocation9 + $0x20] sm:$0xff] %v661
      %678 = vst [vmem:[#allocation9 + $0x28] sm:$0xff] %v662
      %679 = vst [vmem:[#allocation9 + $0x30] sm:$0xff] %v663
      %680 = vst [vmem:[#allocation9 + $0x38] sm:$0xff] %v664
      %681 = vst [vmem:[#allocation9 + $0x40] sm:$0xff] %v665
      %682 = vst [vmem:[#allocation9 + $0x48] sm:$0xff] %v666
      %683 = vst [vmem:[#allocation9 + $0x50] sm:$0xff] %v667
      %684 = vst [vmem:[#allocation9 + $0x58] sm:$0xff] %v668
      %685 = vst [vmem:[#allocation9 + $0x60] sm:$0xff] %v669
      %686 = vst [vmem:[#allocation9 + $0x68] sm:$0xff] %v670
      %687 = vst [vmem:[#allocation9 + $0x70] sm:$0xff] %v671
      %688 = vst [vmem:[#allocation9 + $0x78] sm:$0xff] %v672
    $region45: #{tpu_custom_call.1} parent=1 // pred_fallthru
      _
    // Predicated region
    $region46: #{tpu_custom_call.1} parent=1 // pred_check
      _
    $region47: #{tpu_custom_call.1} parent=1 // pred_check_branch
      %690 = sbr.rel (0) target = $region49
    $region48: #{tpu_custom_call.1} parent=1 // pred_region
      %s692 = ssub.s32 2048, 2048
      %693 = vsyncadd [#allocation5], %s692
      %s694 = sshll.u32 [#allocation9], 4
      %s695 = int_to_ptr.vmem [resolvable:$true] %s694
      %700 = dma.vmem_to_hbm [thread:$0]  %s695, 2048, %s6, [#allocation5], 128, 128, 8
    $region49: #{tpu_custom_call.1} parent=1 // pred_fallthru
      _
    // Predicated region
    $region50: #{tpu_custom_call.1} parent=1 // pred_check
      _
    $region51: #{tpu_custom_call.1} parent=1 // pred_check_branch
      %702 = sbr.rel (0) target = $region53
    $region52: #{tpu_custom_call.1} parent=1 // pred_region
      %703 = dma.done [#allocation5], 2048
    $region53: #{tpu_custom_call.1} parent=1 // pred_fallthru
      _
    %704 = vsyncpa [#allocation4], 1
    %705 = vsyncpa [#allocation7], 1
    %706 = vsyncpa [#allocation5], 1

</llo_original>
